<compile_context>
chip_gen: v7x
topology: tpu7x:2x2x1
jax: 0.10.0
libtpu: 0.0.40
codegen_flags: <defaults>
</compile_context>

<pallas_src>
import functools

import jax
import jax.numpy as jnp
from jax.experimental import pallas as pl
from jax.experimental.pallas import tpu as pltpu  # noqa: F401  (TPU backend extensions)


def _round_up(x: int, m: int) -> int:
    return (x + m - 1) // m * m


def _linear_kernel(x_ref, w_ref, scale_ref, b_ref, o_ref):
    # int8 -> bf16 upcast on the VPU (exact: |q| <= 127 is representable in bf16),
    # one MXU matmul with f32 accumulation, per-channel dequant scale + bias in
    # the f32 epilogue, single unmasked lane-dense store.
    w_bf16 = w_ref[...].astype(jnp.bfloat16)
    acc = jnp.dot(x_ref[...], w_bf16, preferred_element_type=jnp.float32)
    o_ref[...] = (acc * scale_ref[...] + b_ref[...]).astype(o_ref.dtype)


@functools.partial(jax.jit, static_argnames=("out_dim",))
def linear_forward(x, w_q, w_scale, b_f32, *, out_dim):
    """y = (x @ dequant(W_q)) + b.  W_q is pre-transposed (in_pad, out_pad) int8."""
    B, K = x.shape
    Kp, Np = w_q.shape
    assert w_scale.shape == (1, Np)
    assert b_f32.shape == (1, Np)
    assert Kp >= K

    # Pad batch to 16 (full packed bf16 vreg tile) and the contraction dim to the
    # lane-aligned weight extent; zero pads are inert.
    Bp = _round_up(max(B, 1), 16)
    xb = x.astype(jnp.bfloat16)
    if (Bp, Kp) != (B, K):
        xb = jnp.pad(xb, ((0, Bp - B), (0, Kp - K)))

    cost = pl.CostEstimate(
        flops=2 * Bp * Kp * Np,
        transcendentals=0,
        bytes_accessed=2 * Bp * Kp        # bf16 activations
        + Kp * Np                         # int8 weight (dominant term)
        + 4 * Np + 4 * Np                 # f32 scale + bias
        + 4 * Bp * Np,                    # f32 output
    )

    # TODO(synk): for repeated decode-style calls, keep the 256 KiB weight
    # on-chip across invocations (cross-pallas_call prefetch returning a DMA
    # semaphore + VMEM ref, or pltpu.with_memory_space_constraint) to delete the
    # per-call HBM read entirely.
    y_pad = pl.pallas_call(
        _linear_kernel,
        out_shape=jax.ShapeDtypeStruct((Bp, Np), jnp.float32),
        # No grid: whole arrays map to single VMEM blocks (total residency
        # ~0.3 MiB, far under the scoped-VMEM default on v5e/v6e/v7x).  Per the
        # perf review, any K/N grid step (~0.35us each) would cost more than the
        # entire weight DMA, so the single invocation is intentional.
        in_specs=[
            pl.BlockSpec((Bp, Kp), lambda: (0, 0)),   # activations, bf16
            pl.BlockSpec((Kp, Np), lambda: (0, 0)),   # weight, pre-transposed int8
            pl.BlockSpec((1, Np), lambda: (0, 0)),    # per-channel dequant scale, f32
            pl.BlockSpec((1, Np), lambda: (0, 0)),    # bias, f32
        ],
        out_specs=pl.BlockSpec((Bp, Np), lambda: (0, 0)),
        cost_estimate=cost,
    )(xb, w_q, w_scale, b_f32)

    # Strip wrapper-side padding.
    return y_pad[:B, :out_dim]


class LinearNetwork:
    """JAX/Pallas re-implementation of the PyTorch LinearNetwork module."""

    def __init__(self, in_dim=1000, out_dim=200, key=None):
        if key is None:
            key = jax.random.PRNGKey(0)
        kw, kb = jax.random.split(key)
        self.in_dim = in_dim
        self.out_dim = out_dim
        self.k_pad = _round_up(in_dim, 128)
        self.n_pad = _round_up(out_dim, 128)

        # Deterministic init mirroring nn.Linear's uniform(-1/sqrt(in), 1/sqrt(in)).
        bound = 1.0 / jnp.sqrt(jnp.float32(in_dim))
        w = jax.random.uniform(
            kw, (in_dim, out_dim), jnp.float32, minval=-bound, maxval=bound
        )
        b = jax.random.uniform(
            kb, (1, out_dim), jnp.float32, minval=-bound, maxval=bound
        )

        # Per-output-channel symmetric int8 quantization of the pre-transposed
        # weight: w ≈ w_q * scale, w_q in [-127, 127].  Halves the dominant HBM
        # read vs bf16; the scale is applied in the kernel's f32 epilogue.
        max_abs = jnp.max(jnp.abs(w), axis=0, keepdims=True)            # (1, out_dim)
        scale = jnp.where(max_abs > 0, max_abs / 127.0, 1.0)            # (1, out_dim)
        w_q = jnp.clip(jnp.round(w / scale), -127, 127).astype(jnp.int8)

        # Pad to lane-dense (k_pad, n_pad); padded rows/cols are zero and inert.
        self.w_q = jnp.pad(
            w_q, ((0, self.k_pad - in_dim), (0, self.n_pad - out_dim))
        )
        self.w_scale = jnp.pad(
            scale, ((0, 0), (0, self.n_pad - out_dim)), constant_values=1.0
        ).astype(jnp.float32)
        self.b = jnp.pad(b, ((0, 0), (0, self.n_pad - out_dim)))

    def __call__(self, input1):
        return linear_forward(
            input1, self.w_q, self.w_scale, self.b, out_dim=self.out_dim
        )


if __name__ == "__main__":
    in_dim, out_dim, batch = 1000, 200, 8
    key = jax.random.PRNGKey(0)
    k_model, k_x = jax.random.split(key)

    model = LinearNetwork(in_dim=in_dim, out_dim=out_dim, key=k_model)
    x = jax.random.normal(k_x, (batch, in_dim), jnp.float32)

    y = model(x)
    jax.block_until_ready(y)

    # Reference built from the same rounded/quantized operands the kernel uses
    # (bf16-cast activations, dequantized int8 weight, f32 accumulation).
    x_ref = x.astype(jnp.bfloat16).astype(jnp.float32)
    w_deq = (
        model.w_q[:in_dim, :out_dim].astype(jnp.float32)
        * model.w_scale[:, :out_dim]
    )
    b_ref = model.b[:, :out_dim]
    y_ref = x_ref @ w_deq + b_ref

    assert y.shape == (batch, out_dim)
    assert jnp.allclose(y, y_ref, atol=2e-2, rtol=2e-2)

    print("KERNEL_OK")
</pallas_src>

<mosaic_0001>
module attributes {stable_mosaic.version = 11 : i64} {
  func.func @_linear_kernel(%arg0: memref<16x1024xbf16, #tpu.memory_space<vmem>>, %arg1: memref<1024x256xi8, #tpu.memory_space<vmem>>, %arg2: memref<1x256xf32, #tpu.memory_space<vmem>>, %arg3: memref<1x256xf32, #tpu.memory_space<vmem>>, %arg4: memref<16x256xf32, #tpu.memory_space<vmem>>) attributes {dimension_semantics = [], scalar_prefetch = 0 : i64, scratch_operands = 0 : i64, tpu.core_type = #tpu.core_type<tc>} {
    %c0 = arith.constant 0 : index
    %c0_0 = arith.constant 0 : index
    %0 = vector.load %arg1[%c0, %c0_0] : memref<1024x256xi8, #tpu.memory_space<vmem>>, vector<1024x256xi8>
    %1 = arith.sitofp %0 : vector<1024x256xi8> to vector<1024x256xbf16>
    %c0_1 = arith.constant 0 : index
    %c0_2 = arith.constant 0 : index
    %2 = vector.load %arg0[%c0_1, %c0_2] : memref<16x1024xbf16, #tpu.memory_space<vmem>>, vector<16x1024xbf16>
    %cst = arith.constant dense<0.000000e+00> : vector<16x256xf32>
    %3 = tpu.matmul %2, %1, %cst {dimension_numbers = #tpu.dot_dimension_numbers<[1], [0], [0], [1], [0, 0, 1, 1], [], []>} : vector<16x1024xbf16>, vector<1024x256xbf16>, vector<16x256xf32> -> vector<16x256xf32>
    %c0_3 = arith.constant 0 : index
    %c0_4 = arith.constant 0 : index
    %4 = vector.load %arg2[%c0_3, %c0_4] : memref<1x256xf32, #tpu.memory_space<vmem>>, vector<1x256xf32>
    %5 = vector.broadcast %4 : vector<1x256xf32> to vector<16x256xf32>
    %6 = arith.mulf %3, %5 : vector<16x256xf32>
    %c0_5 = arith.constant 0 : index
    %c0_6 = arith.constant 0 : index
    %7 = vector.load %arg3[%c0_5, %c0_6] : memref<1x256xf32, #tpu.memory_space<vmem>>, vector<1x256xf32>
    %8 = vector.broadcast %7 : vector<1x256xf32> to vector<16x256xf32>
    %9 = arith.addf %6, %8 : vector<16x256xf32>
    %c0_7 = arith.constant 0 : index
    %c0_8 = arith.constant 0 : index
    %10 = vector.load %arg4[%c0_7, %c0_8] : memref<16x256xf32, #tpu.memory_space<vmem>>, vector<16x256xf32>
    tpu.vector_store %arg4[%c0_7, %c0_8], %9 {strides = array<i32>} : memref<16x256xf32, #tpu.memory_space<vmem>>, vector<16x256xf32>,
    return
  }
}

</mosaic_0001>

<llo_original>
// kernel: linear_forward.1
$region0: #{linear_forward.1}
  #allocation0 [shape = 'u32[]', space=smem, size = 0x4, offset = 0x4, fixed_abs, tag = 'smem constant byte address 0x4 - core index']
  #allocation1 [shape = 'u32[144,128]{1,0:T(1,128)}', space=vmem, size = 0x12000, scoped, tag = 'internal scratch']
  %s0 = inlined_call_operand.vmem [shape: bf16[16,1024], index: 0, kind: input, shape index: {}]
  %s1 = inlined_call_operand.hbm [shape: s8[1024,256], index: 1, kind: input, shape index: {}]
  %s2 = inlined_call_operand.vmem [shape: f32[1,256], index: 2, kind: input, shape index: {}]
  %s3 = inlined_call_operand.vmem [shape: f32[1,256], index: 3, kind: input, shape index: {}]
  %s4 = inlined_call_operand.vmem [shape: f32[16,256], index: 4, kind: output, shape index: {}]
  %s5 = sld [smem:[#allocation0]]
  $region30: #{linear_forward.1} parent=0
    _
  %s7 = ssub.s32 1, %s5
  %s8 = scalar_select 0, %s7, %s5
  $region1: #{linear_forward.1} parent=0
    #allocation2 [shape = 'u8[262144]{0}', space=vmem, size = 0x40000, scoped, tag = 'input window, operand 1, single buffered']
    #allocation3 [shape = 's32[1]{0}', space=sflag, size = 0x4, scoped, tag = 'scoped memory for linear_forward.1']
    %9 = vsyncpa [#allocation3], 0
    // Predicated region
    $region2: #{linear_forward.1} parent=1 // pred_check
      _
    $region3: #{linear_forward.1} parent=1 // pred_check_branch
      %11 = sbr.rel (0) target = $region5
    $region4: #{linear_forward.1} parent=1 // pred_region
      _
    $region5: #{linear_forward.1} parent=1 // pred_fallthru
      _
    // Predicated region
    $region6: #{linear_forward.1} parent=1 // pred_check
      _
    $region7: #{linear_forward.1} parent=1 // pred_check_branch
      %13 = sbr.rel (0) target = $region9
    $region8: #{linear_forward.1} parent=1 // pred_region
      %s15 = ssub.s32 8192, 8192
      %16 = vsyncadd [#allocation3], %s15
      %s17 = sshll.u32 [#allocation2], 4
      %s18 = int_to_ptr.vmem [resolvable:$true] %s17
      %23 = dma.hbm_to_vmem [thread:$0]  %s1, 8192, %s18, [#allocation3], 256, 256, 16
    $region9: #{linear_forward.1} parent=1 // pred_fallthru
      _
    // Predicated region
    $region10: #{linear_forward.1} parent=1 // pred_check
      _
    $region11: #{linear_forward.1} parent=1 // pred_check_branch
      %25 = sbr.rel (0) target = $region13
    $region12: #{linear_forward.1} parent=1 // pred_region
      _
    $region13: #{linear_forward.1} parent=1 // pred_fallthru
      _
    // Predicated region
    $region14: #{linear_forward.1} parent=1 // pred_check
      _
    $region15: #{linear_forward.1} parent=1 // pred_check_branch
      %27 = sbr.rel (0) target = $region17
    $region16: #{linear_forward.1} parent=1 // pred_region
      _
    $region17: #{linear_forward.1} parent=1 // pred_fallthru
      _
    // Predicated region
    $region18: #{linear_forward.1} parent=1 // pred_check
      _
    $region19: #{linear_forward.1} parent=1 // pred_check_branch
      %29 = sbr.rel (0) target = $region21
    $region20: #{linear_forward.1} parent=1 // pred_region
      %30 = dma.done [#allocation3], 8192
    $region21: #{linear_forward.1} parent=1 // pred_fallthru
      _
    %v31 = vld [vmem:[#allocation2] sm:$0xff]
    %v32 = vld [vmem:[#allocation2 + $0x8] sm:$0xff]
    %v33 = vld [vmem:[#allocation2 + $0x10] sm:$0xff]
    %v34 = vld [vmem:[#allocation2 + $0x18] sm:$0xff]
    %v35 = vld [vmem:[#allocation2 + $0x20] sm:$0xff]
    %v36 = vld [vmem:[#allocation2 + $0x28] sm:$0xff]
    %v37 = vld [vmem:[#allocation2 + $0x30] sm:$0xff]
    %v38 = vld [vmem:[#allocation2 + $0x38] sm:$0xff]
    %v39 = vld [vmem:[#allocation2 + $0x40] sm:$0xff]
    %v40 = vld [vmem:[#allocation2 + $0x48] sm:$0xff]
    %v41 = vld [vmem:[#allocation2 + $0x50] sm:$0xff]
    %v42 = vld [vmem:[#allocation2 + $0x58] sm:$0xff]
    %v43 = vld [vmem:[#allocation2 + $0x60] sm:$0xff]
    %v44 = vld [vmem:[#allocation2 + $0x68] sm:$0xff]
    %v45 = vld [vmem:[#allocation2 + $0x70] sm:$0xff]
    %v46 = vld [vmem:[#allocation2 + $0x78] sm:$0xff]
    %v47 = vld [vmem:[#allocation2 + $0x80] sm:$0xff]
    %v48 = vld [vmem:[#allocation2 + $0x88] sm:$0xff]
    %v49 = vld [vmem:[#allocation2 + $0x90] sm:$0xff]
    %v50 = vld [vmem:[#allocation2 + $0x98] sm:$0xff]
    %v51 = vld [vmem:[#allocation2 + $0xa0] sm:$0xff]
    %v52 = vld [vmem:[#allocation2 + $0xa8] sm:$0xff]
    %v53 = vld [vmem:[#allocation2 + $0xb0] sm:$0xff]
    %v54 = vld [vmem:[#allocation2 + $0xb8] sm:$0xff]
    %v55 = vld [vmem:[#allocation2 + $0xc0] sm:$0xff]
    %v56 = vld [vmem:[#allocation2 + $0xc8] sm:$0xff]
    %v57 = vld [vmem:[#allocation2 + $0xd0] sm:$0xff]
    %v58 = vld [vmem:[#allocation2 + $0xd8] sm:$0xff]
    %v59 = vld [vmem:[#allocation2 + $0xe0] sm:$0xff]
    %v60 = vld [vmem:[#allocation2 + $0xe8] sm:$0xff]
    %v61 = vld [vmem:[#allocation2 + $0xf0] sm:$0xff]
    %v62 = vld [vmem:[#allocation2 + $0xf8] sm:$0xff]
    %v63 = vld [vmem:[#allocation2 + $0x100] sm:$0xff]
    %v64 = vld [vmem:[#allocation2 + $0x108] sm:$0xff]
    %v65 = vld [vmem:[#allocation2 + $0x110] sm:$0xff]
    %v66 = vld [vmem:[#allocation2 + $0x118] sm:$0xff]
    %v67 = vld [vmem:[#allocation2 + $0x120] sm:$0xff]
    %v68 = vld [vmem:[#allocation2 + $0x128] sm:$0xff]
    %v69 = vld [vmem:[#allocation2 + $0x130] sm:$0xff]
    %v70 = vld [vmem:[#allocation2 + $0x138] sm:$0xff]
    %v71 = vld [vmem:[#allocation2 + $0x140] sm:$0xff]
    %v72 = vld [vmem:[#allocation2 + $0x148] sm:$0xff]
    %v73 = vld [vmem:[#allocation2 + $0x150] sm:$0xff]
    %v74 = vld [vmem:[#allocation2 + $0x158] sm:$0xff]
    %v75 = vld [vmem:[#allocation2 + $0x160] sm:$0xff]
    %v76 = vld [vmem:[#allocation2 + $0x168] sm:$0xff]
    %v77 = vld [vmem:[#allocation2 + $0x170] sm:$0xff]
    %v78 = vld [vmem:[#allocation2 + $0x178] sm:$0xff]
    %v79 = vld [vmem:[#allocation2 + $0x180] sm:$0xff]
    %v80 = vld [vmem:[#allocation2 + $0x188] sm:$0xff]
    %v81 = vld [vmem:[#allocation2 + $0x190] sm:$0xff]
    %v82 = vld [vmem:[#allocation2 + $0x198] sm:$0xff]
    %v83 = vld [vmem:[#allocation2 + $0x1a0] sm:$0xff]
    %v84 = vld [vmem:[#allocation2 + $0x1a8] sm:$0xff]
    %v85 = vld [vmem:[#allocation2 + $0x1b0] sm:$0xff]
    %v86 = vld [vmem:[#allocation2 + $0x1b8] sm:$0xff]
    %v87 = vld [vmem:[#allocation2 + $0x1c0] sm:$0xff]
    %v88 = vld [vmem:[#allocation2 + $0x1c8] sm:$0xff]
    %v89 = vld [vmem:[#allocation2 + $0x1d0] sm:$0xff]
    %v90 = vld [vmem:[#allocation2 + $0x1d8] sm:$0xff]
    %v91 = vld [vmem:[#allocation2 + $0x1e0] sm:$0xff]
    %v92 = vld [vmem:[#allocation2 + $0x1e8] sm:$0xff]
    %v93 = vld [vmem:[#allocation2 + $0x1f0] sm:$0xff]
    %v94 = vld [vmem:[#allocation2 + $0x1f8] sm:$0xff]
    %v95 = vunpack.c.l.s8.bf16 %v31
    %v96 = vunpack.c.l.s8.bf16 %v32
    %v97 = vunpack.c.h.s8.bf16 %v31
    %v98 = vunpack.c.h.s8.bf16 %v32
    %v99 = vunpack.c.l.s8.bf16 %v33
    %v100 = vunpack.c.l.s8.bf16 %v34
    %v101 = vunpack.c.h.s8.bf16 %v33
    %v102 = vunpack.c.h.s8.bf16 %v34
    %v103 = vunpack.c.l.s8.bf16 %v35
    %v104 = vunpack.c.l.s8.bf16 %v36
    %v105 = vunpack.c.h.s8.bf16 %v35
    %v106 = vunpack.c.h.s8.bf16 %v36
    %v107 = vunpack.c.l.s8.bf16 %v37
    %v108 = vunpack.c.l.s8.bf16 %v38
    %v109 = vunpack.c.h.s8.bf16 %v37
    %v110 = vunpack.c.h.s8.bf16 %v38
    %v111 = vunpack.c.l.s8.bf16 %v39
    %v112 = vunpack.c.l.s8.bf16 %v40
    %v113 = vunpack.c.h.s8.bf16 %v39
    %v114 = vunpack.c.h.s8.bf16 %v40
    %v115 = vunpack.c.l.s8.bf16 %v41
    %v116 = vunpack.c.l.s8.bf16 %v42
    %v117 = vunpack.c.h.s8.bf16 %v41
    %v118 = vunpack.c.h.s8.bf16 %v42
    %v119 = vunpack.c.l.s8.bf16 %v43
    %v120 = vunpack.c.l.s8.bf16 %v44
    %v121 = vunpack.c.h.s8.bf16 %v43
    %v122 = vunpack.c.h.s8.bf16 %v44
    %v123 = vunpack.c.l.s8.bf16 %v45
    %v124 = vunpack.c.l.s8.bf16 %v46
    %v125 = vunpack.c.h.s8.bf16 %v45
    %v126 = vunpack.c.h.s8.bf16 %v46
    %v127 = vunpack.c.l.s8.bf16 %v47
    %v128 = vunpack.c.l.s8.bf16 %v48
    %v129 = vunpack.c.h.s8.bf16 %v47
    %v130 = vunpack.c.h.s8.bf16 %v48
    %v131 = vunpack.c.l.s8.bf16 %v49
    %v132 = vunpack.c.l.s8.bf16 %v50
    %v133 = vunpack.c.h.s8.bf16 %v49
    %v134 = vunpack.c.h.s8.bf16 %v50
    %v135 = vunpack.c.l.s8.bf16 %v51
    %v136 = vunpack.c.l.s8.bf16 %v52
    %v137 = vunpack.c.h.s8.bf16 %v51
    %v138 = vunpack.c.h.s8.bf16 %v52
    %v139 = vunpack.c.l.s8.bf16 %v53
    %v140 = vunpack.c.l.s8.bf16 %v54
    %v141 = vunpack.c.h.s8.bf16 %v53
    %v142 = vunpack.c.h.s8.bf16 %v54
    %v143 = vunpack.c.l.s8.bf16 %v55
    %v144 = vunpack.c.l.s8.bf16 %v56
    %v145 = vunpack.c.h.s8.bf16 %v55
    %v146 = vunpack.c.h.s8.bf16 %v56
    %v147 = vunpack.c.l.s8.bf16 %v57
    %v148 = vunpack.c.l.s8.bf16 %v58
    %v149 = vunpack.c.h.s8.bf16 %v57
    %v150 = vunpack.c.h.s8.bf16 %v58
    %v151 = vunpack.c.l.s8.bf16 %v59
    %v152 = vunpack.c.l.s8.bf16 %v60
    %v153 = vunpack.c.h.s8.bf16 %v59
    %v154 = vunpack.c.h.s8.bf16 %v60
    %v155 = vunpack.c.l.s8.bf16 %v61
    %v156 = vunpack.c.l.s8.bf16 %v62
    %v157 = vunpack.c.h.s8.bf16 %v61
    %v158 = vunpack.c.h.s8.bf16 %v62
    %v159 = vunpack.c.l.s8.bf16 %v63
    %v160 = vunpack.c.l.s8.bf16 %v64
    %v161 = vunpack.c.h.s8.bf16 %v63
    %v162 = vunpack.c.h.s8.bf16 %v64
    %v163 = vunpack.c.l.s8.bf16 %v65
    %v164 = vunpack.c.l.s8.bf16 %v66
    %v165 = vunpack.c.h.s8.bf16 %v65
    %v166 = vunpack.c.h.s8.bf16 %v66
    %v167 = vunpack.c.l.s8.bf16 %v67
    %v168 = vunpack.c.l.s8.bf16 %v68
    %v169 = vunpack.c.h.s8.bf16 %v67
    %v170 = vunpack.c.h.s8.bf16 %v68
    %v171 = vunpack.c.l.s8.bf16 %v69
    %v172 = vunpack.c.l.s8.bf16 %v70
    %v173 = vunpack.c.h.s8.bf16 %v69
    %v174 = vunpack.c.h.s8.bf16 %v70
    %v175 = vunpack.c.l.s8.bf16 %v71
    %v176 = vunpack.c.l.s8.bf16 %v72
    %v177 = vunpack.c.h.s8.bf16 %v71
    %v178 = vunpack.c.h.s8.bf16 %v72
    %v179 = vunpack.c.l.s8.bf16 %v73
    %v180 = vunpack.c.l.s8.bf16 %v74
    %v181 = vunpack.c.h.s8.bf16 %v73
    %v182 = vunpack.c.h.s8.bf16 %v74
    %v183 = vunpack.c.l.s8.bf16 %v75
    %v184 = vunpack.c.l.s8.bf16 %v76
    %v185 = vunpack.c.h.s8.bf16 %v75
    %v186 = vunpack.c.h.s8.bf16 %v76
    %v187 = vunpack.c.l.s8.bf16 %v77
    %v188 = vunpack.c.l.s8.bf16 %v78
    %v189 = vunpack.c.h.s8.bf16 %v77
    %v190 = vunpack.c.h.s8.bf16 %v78
    %v191 = vunpack.c.l.s8.bf16 %v79
    %v192 = vunpack.c.l.s8.bf16 %v80
    %v193 = vunpack.c.h.s8.bf16 %v79
    %v194 = vunpack.c.h.s8.bf16 %v80
    %v195 = vunpack.c.l.s8.bf16 %v81
    %v196 = vunpack.c.l.s8.bf16 %v82
    %v197 = vunpack.c.h.s8.bf16 %v81
    %v198 = vunpack.c.h.s8.bf16 %v82
    %v199 = vunpack.c.l.s8.bf16 %v83
    %v200 = vunpack.c.l.s8.bf16 %v84
    %v201 = vunpack.c.h.s8.bf16 %v83
    %v202 = vunpack.c.h.s8.bf16 %v84
    %v203 = vunpack.c.l.s8.bf16 %v85
    %v204 = vunpack.c.l.s8.bf16 %v86
    %v205 = vunpack.c.h.s8.bf16 %v85
    %v206 = vunpack.c.h.s8.bf16 %v86
    %v207 = vunpack.c.l.s8.bf16 %v87
    %v208 = vunpack.c.l.s8.bf16 %v88
    %v209 = vunpack.c.h.s8.bf16 %v87
    %v210 = vunpack.c.h.s8.bf16 %v88
    %v211 = vunpack.c.l.s8.bf16 %v89
    %v212 = vunpack.c.l.s8.bf16 %v90
    %v213 = vunpack.c.h.s8.bf16 %v89
    %v214 = vunpack.c.h.s8.bf16 %v90
    %v215 = vunpack.c.l.s8.bf16 %v91
    %v216 = vunpack.c.l.s8.bf16 %v92
    %v217 = vunpack.c.h.s8.bf16 %v91
    %v218 = vunpack.c.h.s8.bf16 %v92
    %v219 = vunpack.c.l.s8.bf16 %v93
    %v220 = vunpack.c.l.s8.bf16 %v94
    %v221 = vunpack.c.h.s8.bf16 %v93
    %v222 = vunpack.c.h.s8.bf16 %v94
    %v223 = vld [vmem:[%s0] sm:$0xff]
    %v224 = vld [vmem:[%s0 + $0x8] sm:$0xff]
    %v225 = vld [vmem:[%s0 + $0x10] sm:$0xff]
    %v226 = vld [vmem:[%s0 + $0x18] sm:$0xff]
    %v227 = vld [vmem:[%s0 + $0x20] sm:$0xff]
    %v228 = vld [vmem:[%s0 + $0x28] sm:$0xff]
    %v229 = vld [vmem:[%s0 + $0x30] sm:$0xff]
    %v230 = vld [vmem:[%s0 + $0x38] sm:$0xff]
    %v239 = vunpack.c.l.b16 %v223
    %v240 = vunpack.c.h.b16 %v223
    %v241 = vunpack.c.l.b16 %v224
    %v242 = vunpack.c.h.b16 %v224
    %v243 = vunpack.c.l.b16 %v225
    %v244 = vunpack.c.h.b16 %v225
    %v245 = vunpack.c.l.b16 %v226
    %v246 = vunpack.c.h.b16 %v226
    %v247 = vunpack.c.l.b16 %v227
    %v248 = vunpack.c.h.b16 %v227
    %v249 = vunpack.c.l.b16 %v228
    %v250 = vunpack.c.h.b16 %v228
    %v251 = vunpack.c.l.b16 %v229
    %v252 = vunpack.c.h.b16 %v229
    %v253 = vunpack.c.l.b16 %v230
    %v254 = vunpack.c.h.b16 %v230
    %v255 = vpack.c.b16 %v247, %v239
    %v256 = vpack.c.b16 %v248, %v240
    %v257 = vpack.c.b16 %v249, %v241
    %v258 = vpack.c.b16 %v250, %v242
    %v259 = vpack.c.b16 %v251, %v243
    %v260 = vpack.c.b16 %v252, %v244
    %v261 = vpack.c.b16 %v253, %v245
    %v262 = vpack.c.b16 %v254, %v246
    %271 = vmatprep.subr.bf16.mxu0 %v96
    %272 = vmatpush1.bf16.msra.mxu0 %v95
    %273 = vmatprep.subr.bf16.mxu0 %v98
    %274 = vmatpush1.bf16.msra.mxu0 %v97
    %275 = vmatprep.subr.bf16.mxu0 %v100
    %276 = vmatpush1.bf16.msra.mxu0 %v99
    %277 = vmatprep.subr.bf16.mxu0 %v102
    %278 = vmatpush1.bf16.msra.mxu0 %v101
    %279 = vmatprep.subr.bf16.mxu0 %v104
    %280 = vmatpush1.bf16.msra.mxu0 %v103
    %281 = vmatprep.subr.bf16.mxu0 %v106
    %282 = vmatpush1.bf16.msra.mxu0 %v105
    %283 = vmatprep.subr.bf16.mxu0 %v108
    %284 = vmatpush1.bf16.msra.mxu0 %v107
    %285 = vmatprep.subr.bf16.mxu0 %v110
    %286 = vmatpush1.bf16.msra.mxu0 %v109
    %287 = vmatprep.subr.bf16.mxu0 %v112
    %288 = vmatpush1.bf16.msra.mxu0 %v111
    %289 = vmatprep.subr.bf16.mxu0 %v114
    %290 = vmatpush1.bf16.msra.mxu0 %v113
    %291 = vmatprep.subr.bf16.mxu0 %v116
    %292 = vmatpush1.bf16.msra.mxu0 %v115
    %293 = vmatprep.subr.bf16.mxu0 %v118
    %294 = vmatpush1.bf16.msra.mxu0 %v117
    %295 = vmatprep.subr.bf16.mxu0 %v120
    %296 = vmatpush1.bf16.msra.mxu0 %v119
    %297 = vmatprep.subr.bf16.mxu0 %v122
    %298 = vmatpush1.bf16.msra.mxu0 %v121
    %299 = vmatprep.subr.bf16.mxu0 %v124
    %300 = vmatpush1.bf16.msra.mxu0 %v123
    %301 = vmatprep.subr.bf16.mxu0 %v126
    %302 = vmatpush1.bf16.msra.mxu0 %v125
    %303 = vmatprep.mubr.bf16.mxu0 %v256
    %304 = vmatmul.mubr.bf16.gmra.mrb[0].mxu0 %v255
    %v305 = vpop.f32.mrb[0].mxu0
    %v306 = vadd.f32 0.0, %v305
    %v307 = vpop.f32.mrb[0].mxu0
    %v308 = vadd.f32 0.0, %v307
    %v309 = vpop.f32.mrb[0].mxu0
    %v310 = vadd.f32 0.0, %v309
    %v311 = vpop.f32.mrb[0].mxu0
    %v312 = vadd.f32 0.0, %v311
    %313 = vdwg.mxu0
    %314 = vmatprep.subr.bf16.mxu0 %v128
    %315 = vmatpush1.bf16.msra.mxu0 %v127
    %316 = vmatprep.subr.bf16.mxu0 %v130
    %317 = vmatpush1.bf16.msra.mxu0 %v129
    %318 = vmatprep.subr.bf16.mxu0 %v132
    %319 = vmatpush1.bf16.msra.mxu0 %v131
    %320 = vmatprep.subr.bf16.mxu0 %v134
    %321 = vmatpush1.bf16.msra.mxu0 %v133
    %322 = vmatprep.subr.bf16.mxu0 %v136
    %323 = vmatpush1.bf16.msra.mxu0 %v135
    %324 = vmatprep.subr.bf16.mxu0 %v138
    %325 = vmatpush1.bf16.msra.mxu0 %v137
    %326 = vmatprep.subr.bf16.mxu0 %v140
    %327 = vmatpush1.bf16.msra.mxu0 %v139
    %328 = vmatprep.subr.bf16.mxu0 %v142
    %329 = vmatpush1.bf16.msra.mxu0 %v141
    %330 = vmatprep.subr.bf16.mxu0 %v144
    %331 = vmatpush1.bf16.msra.mxu0 %v143
    %332 = vmatprep.subr.bf16.mxu0 %v146
    %333 = vmatpush1.bf16.msra.mxu0 %v145
    %334 = vmatprep.subr.bf16.mxu0 %v148
    %335 = vmatpush1.bf16.msra.mxu0 %v147
    %336 = vmatprep.subr.bf16.mxu0 %v150
    %337 = vmatpush1.bf16.msra.mxu0 %v149
    %338 = vmatprep.subr.bf16.mxu0 %v152
    %339 = vmatpush1.bf16.msra.mxu0 %v151
    %340 = vmatprep.subr.bf16.mxu0 %v154
    %341 = vmatpush1.bf16.msra.mxu0 %v153
    %342 = vmatprep.subr.bf16.mxu0 %v156
    %343 = vmatpush1.bf16.msra.mxu0 %v155
    %344 = vmatprep.subr.bf16.mxu0 %v158
    %345 = vmatpush1.bf16.msra.mxu0 %v157
    %346 = vmatprep.mubr.bf16.mxu0 %v258
    %347 = vmatmul.mubr.bf16.gmra.mrb[0].mxu0 %v257
    %v348 = vpop.f32.mrb[0].mxu0
    %v349 = vadd.f32 %v306, %v348
    %v350 = vpop.f32.mrb[0].mxu0
    %v351 = vadd.f32 %v308, %v350
    %v352 = vpop.f32.mrb[0].mxu0
    %v353 = vadd.f32 %v310, %v352
    %v354 = vpop.f32.mrb[0].mxu0
    %v355 = vadd.f32 %v312, %v354
    %356 = vdwg.mxu0
    %357 = vmatprep.subr.bf16.mxu0 %v160
    %358 = vmatpush1.bf16.msra.mxu0 %v159
    %359 = vmatprep.subr.bf16.mxu0 %v162
    %360 = vmatpush1.bf16.msra.mxu0 %v161
    %361 = vmatprep.subr.bf16.mxu0 %v164
    %362 = vmatpush1.bf16.msra.mxu0 %v163
    %363 = vmatprep.subr.bf16.mxu0 %v166
    %364 = vmatpush1.bf16.msra.mxu0 %v165
    %365 = vmatprep.subr.bf16.mxu0 %v168
    %366 = vmatpush1.bf16.msra.mxu0 %v167
    %367 = vmatprep.subr.bf16.mxu0 %v170
    %368 = vmatpush1.bf16.msra.mxu0 %v169
    %369 = vmatprep.subr.bf16.mxu0 %v172
    %370 = vmatpush1.bf16.msra.mxu0 %v171
    %371 = vmatprep.subr.bf16.mxu0 %v174
    %372 = vmatpush1.bf16.msra.mxu0 %v173
    %373 = vmatprep.subr.bf16.mxu0 %v176
    %374 = vmatpush1.bf16.msra.mxu0 %v175
    %375 = vmatprep.subr.bf16.mxu0 %v178
    %376 = vmatpush1.bf16.msra.mxu0 %v177
    %377 = vmatprep.subr.bf16.mxu0 %v180
    %378 = vmatpush1.bf16.msra.mxu0 %v179
    %379 = vmatprep.subr.bf16.mxu0 %v182
    %380 = vmatpush1.bf16.msra.mxu0 %v181
    %381 = vmatprep.subr.bf16.mxu0 %v184
    %382 = vmatpush1.bf16.msra.mxu0 %v183
    %383 = vmatprep.subr.bf16.mxu0 %v186
    %384 = vmatpush1.bf16.msra.mxu0 %v185
    %385 = vmatprep.subr.bf16.mxu0 %v188
    %386 = vmatpush1.bf16.msra.mxu0 %v187
    %387 = vmatprep.subr.bf16.mxu0 %v190
    %388 = vmatpush1.bf16.msra.mxu0 %v189
    %389 = vmatprep.mubr.bf16.mxu0 %v260
    %390 = vmatmul.mubr.bf16.gmra.mrb[0].mxu0 %v259
    %v391 = vpop.f32.mrb[0].mxu0
    %v392 = vadd.f32 %v349, %v391
    %v393 = vpop.f32.mrb[0].mxu0
    %v394 = vadd.f32 %v351, %v393
    %v395 = vpop.f32.mrb[0].mxu0
    %v396 = vadd.f32 %v353, %v395
    %v397 = vpop.f32.mrb[0].mxu0
    %v398 = vadd.f32 %v355, %v397
    %399 = vdwg.mxu0
    %400 = vmatprep.subr.bf16.mxu0 %v192
    %401 = vmatpush1.bf16.msra.mxu0 %v191
    %402 = vmatprep.subr.bf16.mxu0 %v194
    %403 = vmatpush1.bf16.msra.mxu0 %v193
    %404 = vmatprep.subr.bf16.mxu0 %v196
    %405 = vmatpush1.bf16.msra.mxu0 %v195
    %406 = vmatprep.subr.bf16.mxu0 %v198
    %407 = vmatpush1.bf16.msra.mxu0 %v197
    %408 = vmatprep.subr.bf16.mxu0 %v200
    %409 = vmatpush1.bf16.msra.mxu0 %v199
    %410 = vmatprep.subr.bf16.mxu0 %v202
    %411 = vmatpush1.bf16.msra.mxu0 %v201
    %412 = vmatprep.subr.bf16.mxu0 %v204
    %413 = vmatpush1.bf16.msra.mxu0 %v203
    %414 = vmatprep.subr.bf16.mxu0 %v206
    %415 = vmatpush1.bf16.msra.mxu0 %v205
    %416 = vmatprep.subr.bf16.mxu0 %v208
    %417 = vmatpush1.bf16.msra.mxu0 %v207
    %418 = vmatprep.subr.bf16.mxu0 %v210
    %419 = vmatpush1.bf16.msra.mxu0 %v209
    %420 = vmatprep.subr.bf16.mxu0 %v212
    %421 = vmatpush1.bf16.msra.mxu0 %v211
    %422 = vmatprep.subr.bf16.mxu0 %v214
    %423 = vmatpush1.bf16.msra.mxu0 %v213
    %424 = vmatprep.subr.bf16.mxu0 %v216
    %425 = vmatpush1.bf16.msra.mxu0 %v215
    %426 = vmatprep.subr.bf16.mxu0 %v218
    %427 = vmatpush1.bf16.msra.mxu0 %v217
    %428 = vmatprep.subr.bf16.mxu0 %v220
    %429 = vmatpush1.bf16.msra.mxu0 %v219
    %430 = vmatprep.subr.bf16.mxu0 %v222
    %431 = vmatpush1.bf16.msra.mxu0 %v221
    %432 = vmatprep.mubr.bf16.mxu0 %v262
    %433 = vmatmul.mubr.bf16.gmra.mrb[0].mxu0 %v261
    %v434 = vpop.f32.mrb[0].mxu0
    %v435 = vadd.f32 %v392, %v434
    %v436 = vpop.f32.mrb[0].mxu0
    %v437 = vadd.f32 %v394, %v436
    %v438 = vpop.f32.mrb[0].mxu0
    %v439 = vadd.f32 %v396, %v438
    %v440 = vpop.f32.mrb[0].mxu0
    %v441 = vadd.f32 %v398, %v440
    %442 = vdwg.mxu0
    %v443 = vld [vmem:[%s2] sm:$0x3]
    %v445 = vlaneseq
    %v446 = vshrl.u32 %v445, 7
    %v447 = vsub.s32 0, %v446
    %v448 = vrot.slane %v443, %v447
    %v449 = vlaneseq
    %v450 = vshrl.u32 %v449, 7
    %v451 = vsub.s32 1, %v450
    %v452 = vrot.slane %v443, %v451
    %v455 = vmul.f32 %v435, %v448
    %v456 = vmul.f32 %v437, %v452
    %v457 = vmul.f32 %v439, %v448
    %v458 = vmul.f32 %v441, %v452
    %v459 = vld [vmem:[%s3] sm:$0x3]
    %v461 = vlaneseq
    %v462 = vshrl.u32 %v461, 7
    %v463 = vsub.s32 0, %v462
    %v464 = vrot.slane %v459, %v463
    %v465 = vlaneseq
    %v466 = vshrl.u32 %v465, 7
    %v467 = vsub.s32 1, %v466
    %v468 = vrot.slane %v459, %v467
    %v471 = vadd.f32 %v455, %v464
    %v472 = vadd.f32 %v456, %v468
    %v473 = vadd.f32 %v457, %v464
    %v474 = vadd.f32 %v458, %v468
    %475 = vst [vmem:[%s4] sm:$0xff] %v471
    %476 = vst [vmem:[%s4 + $0x8] sm:$0xff] %v472
    %477 = vst [vmem:[%s4 + $0x10] sm:$0xff] %v473
    %478 = vst [vmem:[%s4 + $0x18] sm:$0xff] %v474
    // Predicated region
    $region22: #{linear_forward.1} parent=1 // pred_check
      _
    $region23: #{linear_forward.1} parent=1 // pred_check_branch
      %480 = sbr.rel (0) target = $region25
    $region24: #{linear_forward.1} parent=1 // pred_region
      _
    $region25: #{linear_forward.1} parent=1 // pred_fallthru
      _
    // Predicated region
    $region26: #{linear_forward.1} parent=1 // pred_check
      _
    $region27: #{linear_forward.1} parent=1 // pred_check_branch
      %482 = sbr.rel (0) target = $region29
    $region28: #{linear_forward.1} parent=1 // pred_region
      _
    $region29: #{linear_forward.1} parent=1 // pred_fallthru
      _
    %483 = vsyncpa [#allocation3], 1

</llo_original>
